<compile_context>
chip_gen: v6e
topology: v6e:2x2x1
jax: 0.10.0
libtpu: 0.0.40
codegen_flags: <defaults>
</compile_context>

<pallas_src>
import functools

import jax
import jax.numpy as jnp
from jax.experimental import pallas as pl
from jax.experimental.pallas import tpu as pltpu


def _round_up(a: int, m: int) -> int:
    return -(-a // m) * m


def _realnvp_kernel(x_ref, w1_ref, b1_ref, w2_ref, b2_ref, y_ref, logdet_ref,
                    *, half: int, hidden_p: int, fuse_l2: bool, reverse: bool):
    x = x_ref[...]
    x1 = x[:, :half]
    x2 = x[:, half:].astype(jnp.float32)

    # Fused first layer of net_s and net_t: one MXU pass, compute-dtype
    # operands, f32 accumulation; fuse ReLU + downcast before slicing.
    h = jnp.dot(x1.astype(w1_ref.dtype), w1_ref[...],
                preferred_element_type=jnp.float32) + b1_ref[...]
    h = jnp.maximum(h, 0.0).astype(w2_ref.dtype)

    if fuse_l2:
        # Block-diagonal fused second layer: one matmul, N = 2*half.
        st = jnp.dot(h, w2_ref[...],
                     preferred_element_type=jnp.float32) + b2_ref[...]
        s = jnp.tanh(st[:, :half])
        t = st[:, half:]
    else:
        # half >= 128: separate second-layer matmuls (no wasted FLOPs).
        # hidden_p is a multiple of 128 so the h split is lane-aligned.
        s = jnp.tanh(jnp.dot(h[:, :hidden_p], w2_ref[0],
                             preferred_element_type=jnp.float32) + b2_ref[0])
        t = jnp.dot(h[:, hidden_p:], w2_ref[1],
                    preferred_element_type=jnp.float32) + b2_ref[1]

    if not reverse:
        y2 = x2 * jnp.exp(s) + t
        log_det = jnp.sum(s, axis=1, keepdims=True)
    else:
        y2 = (x2 - t) * jnp.exp(-s)
        log_det = -jnp.sum(s, axis=1, keepdims=True)

    # Direct sub-slice stores (no concatenate temp); identity half passes
    # through with no dtype round trip.
    y_ref[:, :half] = x1.astype(y_ref.dtype)
    y_ref[:, half:] = y2.astype(y_ref.dtype)
    logdet_ref[...] = log_det.astype(logdet_ref.dtype)


def realnvp_block_forward(x, params, *, reverse: bool = False,
                          block_b: int = 512,
                          compute_dtype=jnp.bfloat16,
                          hidden_align: int = 128,
                          donate_x: bool = False,
                          vmem_limit_bytes: int | None = None):
    """Pallas implementation of RealNVPBlock.forward.

    x: (B, dim) float32. Returns (y, log_det) with y: (B, dim), log_det: (B,).
    """
    B, dim = x.shape
    half = dim // 2
    assert dim == 2 * half, "dim must be even"
    assert block_b % 8 == 0

    ws1, bs1, ws2, bs2, wt1, bt1, wt2, bt2 = params
    hidden = ws1.shape[1]
    hidden_p = _round_up(hidden, hidden_align)
    pad_h = hidden_p - hidden
    fuse_l2 = half < 128

    # ---- One-time weight prep (small vs. activation traffic). -------------
    pad_cols = lambda a: jnp.pad(a, ((0, 0), (0, pad_h)))
    pad_rows = lambda a: jnp.pad(a, ((0, pad_h), (0, 0)))
    w1 = jnp.concatenate([pad_cols(ws1), pad_cols(wt1)],
                         axis=1).astype(compute_dtype)           # (half, 2*hidden_p)
    b1 = jnp.concatenate([pad_cols(bs1), pad_cols(bt1)],
                         axis=1).astype(jnp.float32)             # (1, 2*hidden_p)
    ws2_p, wt2_p = pad_rows(ws2), pad_rows(wt2)
    if fuse_l2:
        z = jnp.zeros((hidden_p, half), ws2.dtype)
        w2 = jnp.concatenate(
            [jnp.concatenate([ws2_p, z], axis=1),
             jnp.concatenate([z, wt2_p], axis=1)],
            axis=0).astype(compute_dtype)                        # (2*hidden_p, 2*half)
        b2 = jnp.concatenate([bs2, bt2], axis=1).astype(jnp.float32)   # (1, 2*half)
    else:
        w2 = jnp.stack([ws2_p, wt2_p], axis=0).astype(compute_dtype)   # (2, hidden_p, half)
        b2 = jnp.stack([bs2, bt2], axis=0).astype(jnp.float32)         # (2, 1, half)

    # ---- Batch tiling: no padding of x (ragged last block is masked). -----
    if B > block_b:
        tb = block_b
    else:
        # Prefer >= 2 grid blocks so both v7x TensorCores get work.
        tb = min(_round_up(pl.cdiv(B, 2), 8), _round_up(B, 8))
    num_blocks = pl.cdiv(B, tb)

    x_spec = pl.BlockSpec((tb, dim), lambda i: (i, 0))
    y_spec = pl.BlockSpec((tb, dim), lambda i: (i, 0))
    ld_spec = pl.BlockSpec((tb, 1), lambda i: (i, 0))
    const_specs = [pl.BlockSpec(a.shape, lambda i, n=a.ndim: (0,) * n)
                   for a in (w1, b1, w2, b2)]

    # ---- Cost estimate + explicit VMEM budget. -----------------------------
    c_size = jnp.dtype(compute_dtype).itemsize
    weight_bytes = w1.size * c_size + w2.size * c_size + (b1.size + b2.size) * 4
    flops = 2 * B * half * (2 * hidden_p)
    flops += (2 * B * (2 * hidden_p) * (2 * half)) if fuse_l2 else (4 * B * hidden_p * half)
    cost = pl.CostEstimate(
        flops=flops,
        transcendentals=2 * B * half,                     # tanh + exp
        bytes_accessed=2 * B * dim * x.dtype.itemsize + B * 4 + weight_bytes)

    if vmem_limit_bytes is None:
        act = 2 * 2 * tb * dim * 4 + 2 * tb * 128 * 4     # x, y, log_det blocks (dbl-buffered)
        tmp = tb * 2 * hidden_p * (4 + c_size) + 6 * tb * dim * 4
        est = 2 * weight_bytes + act + tmp
        vmem_limit_bytes = int(min(64 * 2**20, max(int(1.5 * est), 32 * 2**20)))

    kernel = functools.partial(_realnvp_kernel, half=half, hidden_p=hidden_p,
                               fuse_l2=fuse_l2, reverse=reverse)

    y, log_det = pl.pallas_call(
        kernel,
        grid=(num_blocks,),
        out_shape=(
            jax.ShapeDtypeStruct((B, dim), x.dtype),
            jax.ShapeDtypeStruct((B, 1), jnp.float32),
        ),
        in_specs=[x_spec] + const_specs,
        out_specs=(y_spec, ld_spec),
        input_output_aliases=({0: 0} if donate_x else {}),
        compiler_params=pltpu.CompilerParams(
            dimension_semantics=("parallel",),
            vmem_limit_bytes=vmem_limit_bytes),
        cost_estimate=cost,
    )(x, w1, b1, w2, b2)

    return y, log_det[:, 0]


def init_params(key, dim, hidden_dim, dtype=jnp.float32):
    """Deterministic synthetic parameters. Weights stored as (in, out)."""
    half = dim // 2
    ks = jax.random.split(key, 8)
    scale = 0.1
    ws1 = scale * jax.random.normal(ks[0], (half, hidden_dim), dtype)
    bs1 = scale * jax.random.normal(ks[1], (1, hidden_dim), dtype)
    ws2 = scale * jax.random.normal(ks[2], (hidden_dim, half), dtype)
    bs2 = scale * jax.random.normal(ks[3], (1, half), dtype)
    wt1 = scale * jax.random.normal(ks[4], (half, hidden_dim), dtype)
    bt1 = scale * jax.random.normal(ks[5], (1, hidden_dim), dtype)
    wt2 = scale * jax.random.normal(ks[6], (hidden_dim, half), dtype)
    bt2 = scale * jax.random.normal(ks[7], (1, half), dtype)
    return (ws1, bs1, ws2, bs2, wt1, bt1, wt2, bt2)


def _reference_forward(x, params, reverse=False):
    """Pure-JAX f32 reference for correctness checking."""
    ws1, bs1, ws2, bs2, wt1, bt1, wt2, bt2 = params
    half = x.shape[1] // 2
    x1, x2 = x[:, :half], x[:, half:]
    s = jnp.tanh(jnp.maximum(x1 @ ws1 + bs1, 0.0) @ ws2 + bs2)
    t = jnp.maximum(x1 @ wt1 + bt1, 0.0) @ wt2 + bt2
    if not reverse:
        y2 = x2 * jnp.exp(s) + t
        log_det = s.sum(axis=1)
    else:
        y2 = (x2 - t) * jnp.exp(-s)
        log_det = -s.sum(axis=1)
    return jnp.concatenate([x1, y2], axis=1), log_det


if __name__ == "__main__":
    key = jax.random.PRNGKey(0)
    k_x, k_p, k_x2, k_p2 = jax.random.split(key, 4)

    # --- Case 1: small even batch, half < 128 (fused block-diag 2nd layer). -
    batch, dim, hidden_dim = 8, 8, 32
    x = jax.random.normal(k_x, (batch, dim), jnp.float32)
    params = init_params(k_p, dim, hidden_dim)

    y, log_det = realnvp_block_forward(x, params, reverse=False)
    jax.block_until_ready((y, log_det))
    y_ref, ld_ref = _reference_forward(x, params, reverse=False)
    assert y.shape == (batch, dim) and log_det.shape == (batch,)
    # bf16 MXU operands -> modest tolerance vs the pure-f32 reference.
    assert jnp.allclose(y, y_ref, atol=1e-2, rtol=1e-2)
    assert jnp.allclose(log_det, ld_ref, atol=1e-2, rtol=1e-2)

    # Reverse path: inverting the forward output should recover x.
    x_rec, ld_inv = realnvp_block_forward(y, params, reverse=True)
    jax.block_until_ready((x_rec, ld_inv))
    assert jnp.allclose(x_rec, x, atol=5e-2, rtol=5e-2)
    assert jnp.allclose(ld_inv, -log_det, atol=1e-2, rtol=1e-2)

    # --- Case 2: ragged batch (B % tb != 0), half >= 128 (separate 2nd-layer
    # matmuls), hidden padded 96 -> 128.  Exercises the masked last block,
    # the lane-aligned h split and the 2-block megacore grid.
    batch2, dim2, hidden2 = 20, 256, 96
    x2 = jax.random.normal(k_x2, (batch2, dim2), jnp.float32)
    params2 = init_params(k_p2, dim2, hidden2)
    y2, ld2 = realnvp_block_forward(x2, params2, reverse=False)
    jax.block_until_ready((y2, ld2))
    y2_ref, ld2_ref = _reference_forward(x2, params2, reverse=False)
    assert y2.shape == (batch2, dim2) and ld2.shape == (batch2,)
    # Identity half passes through untouched (also checks ragged masking).
    assert jnp.allclose(y2[:, :dim2 // 2], x2[:, :dim2 // 2])
    # Smoke-test tolerances (bf16 operands, K=128/96); tight check is case 1.
    assert jnp.allclose(y2, y2_ref, atol=1.5e-1, rtol=1.5e-1)
    assert jnp.allclose(ld2, ld2_ref, atol=6e-1, rtol=1e-1)

    print("KERNEL_OK")
</pallas_src>

<mosaic_0001>
module attributes {stable_mosaic.version = 11 : i64} {
  func.func @_realnvp_kernel(%arg0: i32, %arg1: memref<8x8xf32, #tpu.memory_space<vmem>>, %arg2: memref<4x256xbf16, #tpu.memory_space<vmem>>, %arg3: memref<1x256xf32, #tpu.memory_space<vmem>>, %arg4: memref<256x8xbf16, #tpu.memory_space<vmem>>, %arg5: memref<1x8xf32, #tpu.memory_space<vmem>>, %arg6: memref<8x8xf32, #tpu.memory_space<vmem>>, %arg7: memref<8x1xf32, #tpu.memory_space<vmem>>) attributes {dimension_semantics = [#tpu.dimension_semantics<parallel>], iteration_bounds = array<i64: 1>, scalar_prefetch = 0 : i64, scratch_operands = 0 : i64, tpu.core_type = #tpu.core_type<tc>, window_params = [{transform_indices = @transform_0, window_bounds = array<i64: 8, 8>}, {pipeline_mode = #tpu.pipeline_mode<synchronous>, transform_indices = @transform_1, window_bounds = array<i64: 4, 256>}, {pipeline_mode = #tpu.pipeline_mode<synchronous>, transform_indices = @transform_2, window_bounds = array<i64: 1, 256>}, {pipeline_mode = #tpu.pipeline_mode<synchronous>, transform_indices = @transform_3, window_bounds = array<i64: 256, 8>}, {pipeline_mode = #tpu.pipeline_mode<synchronous>, transform_indices = @transform_4, window_bounds = array<i64: 1, 8>}, {transform_indices = @transform_5, window_bounds = array<i64: 8, 8>}, {transform_indices = @transform_6, window_bounds = array<i64: 8, 1>}]} {
    %c0 = arith.constant 0 : index
    %c0_0 = arith.constant 0 : index
    %0 = vector.load %arg1[%c0, %c0_0] : memref<8x8xf32, #tpu.memory_space<vmem>>, vector<8x8xf32>
    %1 = vector.extract_strided_slice %0 {offsets = [0, 0], sizes = [8, 4], strides = [1, 1]} : vector<8x8xf32> to vector<8x4xf32>
    %2 = vector.extract_strided_slice %0 {offsets = [0, 4], sizes = [8, 4], strides = [1, 1]} : vector<8x8xf32> to vector<8x4xf32>
    %3 = arith.truncf %1 : vector<8x4xf32> to vector<8x4xbf16>
    %c0_1 = arith.constant 0 : index
    %c0_2 = arith.constant 0 : index
    %4 = vector.load %arg2[%c0_1, %c0_2] : memref<4x256xbf16, #tpu.memory_space<vmem>>, vector<4x256xbf16>
    %cst = arith.constant dense<0.000000e+00> : vector<8x256xf32>
    %5 = tpu.matmul %3, %4, %cst {dimension_numbers = #tpu.dot_dimension_numbers<[1], [0], [0], [1], [0, 0, 1, 1], [], []>} : vector<8x4xbf16>, vector<4x256xbf16>, vector<8x256xf32> -> vector<8x256xf32>
    %c0_3 = arith.constant 0 : index
    %c0_4 = arith.constant 0 : index
    %6 = vector.load %arg3[%c0_3, %c0_4] : memref<1x256xf32, #tpu.memory_space<vmem>>, vector<1x256xf32>
    %7 = vector.broadcast %6 : vector<1x256xf32> to vector<8x256xf32>
    %8 = arith.addf %5, %7 : vector<8x256xf32>
    %cst_5 = arith.constant 0.000000e+00 : f32
    %9 = vector.broadcast %cst_5 : f32 to vector<8x256xf32>
    %10 = arith.maximumf %8, %9 : vector<8x256xf32>
    %11 = arith.truncf %10 : vector<8x256xf32> to vector<8x256xbf16>
    %c0_6 = arith.constant 0 : index
    %c0_7 = arith.constant 0 : index
    %12 = vector.load %arg4[%c0_6, %c0_7] : memref<256x8xbf16, #tpu.memory_space<vmem>>, vector<256x8xbf16>
    %cst_8 = arith.constant dense<0.000000e+00> : vector<8x8xf32>
    %13 = tpu.matmul %11, %12, %cst_8 {dimension_numbers = #tpu.dot_dimension_numbers<[1], [0], [0], [1], [0, 0, 1, 1], [], []>} : vector<8x256xbf16>, vector<256x8xbf16>, vector<8x8xf32> -> vector<8x8xf32>
    %c0_9 = arith.constant 0 : index
    %c0_10 = arith.constant 0 : index
    %14 = vector.load %arg5[%c0_9, %c0_10] : memref<1x8xf32, #tpu.memory_space<vmem>>, vector<1x8xf32>
    %15 = vector.broadcast %14 : vector<1x8xf32> to vector<8x8xf32>
    %16 = arith.addf %13, %15 : vector<8x8xf32>
    %17 = vector.extract_strided_slice %16 {offsets = [0, 0], sizes = [8, 4], strides = [1, 1]} : vector<8x8xf32> to vector<8x4xf32>
    %18 = math.tanh %17 : vector<8x4xf32>
    %19 = vector.extract_strided_slice %16 {offsets = [0, 4], sizes = [8, 4], strides = [1, 1]} : vector<8x8xf32> to vector<8x4xf32>
    %20 = math.exp %18 : vector<8x4xf32>
    %21 = arith.mulf %2, %20 : vector<8x4xf32>
    %22 = arith.addf %21, %19 : vector<8x4xf32>
    %cst_11 = arith.constant dense<0.000000e+00> : vector<8xf32>
    %23 = vector.multi_reduction <add>, %18, %cst_11 [1] : vector<8x4xf32> to vector<8xf32>
    %24 = vector.shape_cast %23 : vector<8xf32> to vector<8x1xf32>
    %c0_12 = arith.constant 0 : index
    %c0_13 = arith.constant 0 : index
    %25 = vector.load %arg6[%c0_12, %c0_13] : memref<8x8xf32, #tpu.memory_space<vmem>>, vector<8x4xf32>
    tpu.vector_store %arg6[%c0_12, %c0_13], %1 {strides = array<i32>} : memref<8x8xf32, #tpu.memory_space<vmem>>, vector<8x4xf32>,
    %c0_14 = arith.constant 0 : index
    %c4 = arith.constant 4 : index
    %26 = vector.load %arg6[%c0_14, %c4] : memref<8x8xf32, #tpu.memory_space<vmem>>, vector<8x4xf32>
    tpu.vector_store %arg6[%c0_14, %c4], %22 {strides = array<i32>} : memref<8x8xf32, #tpu.memory_space<vmem>>, vector<8x4xf32>,
    %c0_15 = arith.constant 0 : index
    %c0_16 = arith.constant 0 : index
    %27 = vector.load %arg7[%c0_15, %c0_16] : memref<8x1xf32, #tpu.memory_space<vmem>>, vector<8x1xf32>
    tpu.vector_store %arg7[%c0_15, %c0_16], %24 {strides = array<i32>} : memref<8x1xf32, #tpu.memory_space<vmem>>, vector<8x1xf32>,
    return
  }
  func.func @transform_0(%arg0: i32) -> (i32, i32) {
    %c0_i32 = arith.constant 0 : i32
    %c0_i32_0 = arith.constant 0 : i32
    return %arg0, %c0_i32 : i32, i32
  }
  func.func @transform_1(%arg0: i32) -> (i32, i32) {
    %c0_i32 = arith.constant 0 : i32
    %c0_i32_0 = arith.constant 0 : i32
    %c0_i32_1 = arith.constant 0 : i32
    return %c0_i32, %c0_i32_0 : i32, i32
  }
  func.func @transform_2(%arg0: i32) -> (i32, i32) {
    %c0_i32 = arith.constant 0 : i32
    %c0_i32_0 = arith.constant 0 : i32
    %c0_i32_1 = arith.constant 0 : i32
    return %c0_i32, %c0_i32_0 : i32, i32
  }
  func.func @transform_3(%arg0: i32) -> (i32, i32) {
    %c0_i32 = arith.constant 0 : i32
    %c0_i32_0 = arith.constant 0 : i32
    %c0_i32_1 = arith.constant 0 : i32
    return %c0_i32, %c0_i32_0 : i32, i32
  }
  func.func @transform_4(%arg0: i32) -> (i32, i32) {
    %c0_i32 = arith.constant 0 : i32
    %c0_i32_0 = arith.constant 0 : i32
    %c0_i32_1 = arith.constant 0 : i32
    return %c0_i32, %c0_i32_0 : i32, i32
  }
  func.func @transform_5(%arg0: i32) -> (i32, i32) {
    %c0_i32 = arith.constant 0 : i32
    %c0_i32_0 = arith.constant 0 : i32
    return %arg0, %c0_i32 : i32, i32
  }
  func.func @transform_6(%arg0: i32) -> (i32, i32) {
    %c0_i32 = arith.constant 0 : i32
    %c0_i32_0 = arith.constant 0 : i32
    return %arg0, %c0_i32 : i32, i32
  }
}

</mosaic_0001>

<llo_original>
// kernel: tpu_custom_call.1
$region0: #{tpu_custom_call.1}
  #allocation0 [shape = 'u32[]', space=smem, size = 0x4, offset = 0x4, fixed_abs, tag = 'smem constant byte address 0x4 - core index']
  #allocation1 [shape = 'u32[144,128]{1,0:T(1,128)}', space=vmem, size = 0x12000, scoped, tag = 'internal scratch']
  %s0 = inlined_call_operand.vmem [shape: f32[8,8], index: 0, kind: input, shape index: {}]
  %s1 = inlined_call_operand.vmem [shape: bf16[4,256], index: 1, kind: input, shape index: {}]
  %s2 = inlined_call_operand.vmem [shape: f32[1,256], index: 2, kind: input, shape index: {}]
  %s3 = inlined_call_operand.vmem [shape: bf16[256,8], index: 3, kind: input, shape index: {}]
  %s4 = inlined_call_operand.vmem [shape: f32[1,8], index: 4, kind: input, shape index: {}]
  %s5 = inlined_call_operand.hbm [shape: f32[8,8], index: 5, kind: output, shape index: {0}]
  %s6 = inlined_call_operand.vmem [shape: f32[8,1], index: 6, kind: output, shape index: {1}]
  %7 = xla_tuple %s5, %s6
  %s8 = sld [smem:[#allocation0]]
  $region38: #{tpu_custom_call.1} parent=0
    _
  %s10 = ssub.s32 1, %s8
  %s11 = scalar_select 0, %s10, %s8
  $region1: #{tpu_custom_call.1} parent=0
    #allocation2 [shape = 'u8[4096]{0}', space=vmem, size = 0x1000, scoped, tag = 'output window, operand 0, single buffered']
    #allocation3 [shape = 's32[1]{0}', space=sflag, size = 0x4, scoped, tag = 'scoped memory for tpu_custom_call.1']
    %12 = vsyncpa [#allocation3], 0
    // Predicated region
    $region2: #{tpu_custom_call.1} parent=1 // pred_check
      _
    $region3: #{tpu_custom_call.1} parent=1 // pred_check_branch
      %14 = sbr.rel (0) target = $region5
    $region4: #{tpu_custom_call.1} parent=1 // pred_region
      _
    $region5: #{tpu_custom_call.1} parent=1 // pred_fallthru
      _
    // Predicated region
    $region6: #{tpu_custom_call.1} parent=1 // pred_check
      _
    $region7: #{tpu_custom_call.1} parent=1 // pred_check_branch
      %16 = sbr.rel (0) target = $region9
    $region8: #{tpu_custom_call.1} parent=1 // pred_region
      _
    $region9: #{tpu_custom_call.1} parent=1 // pred_fallthru
      _
    // Predicated region
    $region10: #{tpu_custom_call.1} parent=1 // pred_check
      _
    $region11: #{tpu_custom_call.1} parent=1 // pred_check_branch
      %18 = sbr.rel (0) target = $region13
    $region12: #{tpu_custom_call.1} parent=1 // pred_region
      _
    $region13: #{tpu_custom_call.1} parent=1 // pred_fallthru
      _
    // Predicated region
    $region14: #{tpu_custom_call.1} parent=1 // pred_check
      _
    $region15: #{tpu_custom_call.1} parent=1 // pred_check_branch
      %20 = sbr.rel (0) target = $region17
    $region16: #{tpu_custom_call.1} parent=1 // pred_region
      _
    $region17: #{tpu_custom_call.1} parent=1 // pred_fallthru
      _
    // Predicated region
    $region18: #{tpu_custom_call.1} parent=1 // pred_check
      _
    $region19: #{tpu_custom_call.1} parent=1 // pred_check_branch
      %22 = sbr.rel (0) target = $region21
    $region20: #{tpu_custom_call.1} parent=1 // pred_region
      _
    $region21: #{tpu_custom_call.1} parent=1 // pred_fallthru
      _
    %v24 = vld [vmem:[%s0] sm:$0xff]
    %v25 = vpack.c.bf16 %v24, %v24
    %v26 = vld [vmem:[%s1] sm:$0xf]
    %v27 = vld [vmem:[%s2] sm:$0x3]
    %v29 = vlaneseq
    %v30 = vshrl.u32 %v29, 7
    %v31 = vsub.s32 0, %v30
    %v32 = vrot.slane %v27, %v31
    %v33 = vlaneseq
    %v34 = vshrl.u32 %v33, 7
    %v35 = vsub.s32 1, %v34
    %v36 = vrot.slane %v27, %v35
    %v41 = vunpack.c.l.s4 1983009808
    %v42 = vunpack.c.0.s8 %v41
    %v43 = vlaneseq
    %v44 = vshrl.u32 %v43, 7
    %v45 = vsub.s32 %v42, %v44
    %v46 = vrot.slane %v26, %v45
    %v47 = vcombine.high %v46, %v46
    %vm48 = vcmask 31744
    %v50 = vsel %vm48, %v25, 0
    %vm52 = vcmask 1041408
    %v54 = vsel %vm52, %v46, 0
    %v57 = vsel %vm52, %v47, 0
    %59 = vmatprep.subr.bf16.mxu0 0
    %60 = vmatpush1.bf16.msra.mxu0 0
    %61 = vmatprep.subr.bf16.mxu0 0
    %62 = vmatpush1.bf16.msra.mxu0 0
    %63 = vmatprep.subr.bf16.mxu0 0
    %64 = vmatpush1.bf16.msra.mxu0 0
    %65 = vmatprep.subr.bf16.mxu0 0
    %66 = vmatpush1.bf16.msra.mxu0 0
    %67 = vmatprep.subr.bf16.mxu0 0
    %68 = vmatpush1.bf16.msra.mxu0 0
    %69 = vmatprep.subr.bf16.mxu0 0
    %70 = vmatpush1.bf16.msra.mxu0 0
    %71 = vmatprep.subr.bf16.mxu0 0
    %72 = vmatpush1.bf16.msra.mxu0 0
    %73 = vmatprep.subr.bf16.mxu0 %v57
    %74 = vmatpush1.bf16.msra.mxu0 %v54
    %75 = vmatprep.subr.bf16.mxu0 0
    %76 = vmatpush2.bf16.msra.mxu0 0
    %77 = vmatprep.subr.bf16.mxu0 0
    %78 = vmatpush2.bf16.msra.mxu0 0
    %79 = vmatprep.subr.bf16.mxu0 0
    %80 = vmatpush2.bf16.msra.mxu0 0
    %81 = vmatprep.subr.bf16.mxu0 0
    %82 = vmatpush2.bf16.msra.mxu0 0
    %83 = vmatprep.subr.bf16.mxu0 0
    %84 = vmatpush2.bf16.msra.mxu0 0
    %85 = vmatprep.subr.bf16.mxu0 0
    %86 = vmatpush2.bf16.msra.mxu0 0
    %87 = vmatprep.subr.bf16.mxu0 0
    %88 = vmatpush2.bf16.msra.mxu0 0
    %89 = vmatprep.subr.bf16.mxu0 0
    %90 = vmatpush2.bf16.msra.mxu0 0
    %91 = vmatprep.mubr.bf16.mxu0 0
    %92 = vmatmul.mubr.bf16.gmra.mxu0 %v50
    %v93 = vpop.f32.mrf.mxu0
    %v94 = vadd.f32 %v32, %v93
    %v95 = vpop.f32.mrf.mxu0
    %v96 = vadd.f32 %v36, %v95
    %v97 = vpop.f32.mrf.mxu0
    %v98 = vpop.f32.mrf.mxu0
    %99 = vdwg.mxu0
    %v100 = vmax.f32 %v94, 0.0
    %v101 = vmax.f32 %v96, 0.0
    %v102 = vpack.c.bf16 %v100, %v100
    %v103 = vpack.c.bf16 %v101, %v101
    %v104 = vld [vmem:[%s3] sm:$0xf]
    %v105 = vld [vmem:[%s3 + $0x4] sm:$0xf]
    %v106 = vld [vmem:[%s3 + $0x8] sm:$0xf]
    %v107 = vld [vmem:[%s3 + $0xc] sm:$0xf]
    %v108 = vld [vmem:[%s3 + $0x10] sm:$0xf]
    %v109 = vld [vmem:[%s3 + $0x14] sm:$0xf]
    %v110 = vld [vmem:[%s3 + $0x18] sm:$0xf]
    %v111 = vld [vmem:[%s3 + $0x1c] sm:$0xf]
    %v112 = vld [vmem:[%s3 + $0x20] sm:$0xf]
    %v113 = vld [vmem:[%s3 + $0x24] sm:$0xf]
    %v114 = vld [vmem:[%s3 + $0x28] sm:$0xf]
    %v115 = vld [vmem:[%s3 + $0x2c] sm:$0xf]
    %v116 = vld [vmem:[%s3 + $0x30] sm:$0xf]
    %v117 = vld [vmem:[%s3 + $0x34] sm:$0xf]
    %v118 = vld [vmem:[%s3 + $0x38] sm:$0xf]
    %v119 = vld [vmem:[%s3 + $0x3c] sm:$0xf]
    %v120 = vld [vmem:[%s3 + $0x40] sm:$0xf]
    %v121 = vld [vmem:[%s3 + $0x44] sm:$0xf]
    %v122 = vld [vmem:[%s3 + $0x48] sm:$0xf]
    %v123 = vld [vmem:[%s3 + $0x4c] sm:$0xf]
    %v124 = vld [vmem:[%s3 + $0x50] sm:$0xf]
    %v125 = vld [vmem:[%s3 + $0x54] sm:$0xf]
    %v126 = vld [vmem:[%s3 + $0x58] sm:$0xf]
    %v127 = vld [vmem:[%s3 + $0x5c] sm:$0xf]
    %v128 = vld [vmem:[%s3 + $0x60] sm:$0xf]
    %v129 = vld [vmem:[%s3 + $0x64] sm:$0xf]
    %v130 = vld [vmem:[%s3 + $0x68] sm:$0xf]
    %v131 = vld [vmem:[%s3 + $0x6c] sm:$0xf]
    %v132 = vld [vmem:[%s3 + $0x70] sm:$0xf]
    %v133 = vld [vmem:[%s3 + $0x74] sm:$0xf]
    %v134 = vld [vmem:[%s3 + $0x78] sm:$0xf]
    %v135 = vld [vmem:[%s3 + $0x7c] sm:$0xf]
    %v136 = vld [vmem:[%s4] sm:$0x1]
    %v138 = vlaneseq
    %v139 = vshrl.u32 %v138, 7
    %v140 = vsub.s32 0, %v139
    %v141 = vrot.slane %v136, %v140
    %v175 = vunpack.c.l.b16 %v104
    %v176 = vunpack.c.l.b16 %v105
    %v177 = vunpack.c.l.b16 %v106
    %v178 = vunpack.c.l.b16 %v107
    %v179 = vunpack.c.l.b16 %v108
    %v180 = vunpack.c.l.b16 %v109
    %v181 = vunpack.c.l.b16 %v110
    %v182 = vunpack.c.l.b16 %v111
    %v183 = vunpack.c.l.b16 %v112
    %v184 = vunpack.c.l.b16 %v113
    %v185 = vunpack.c.l.b16 %v114
    %v186 = vunpack.c.l.b16 %v115
    %v187 = vunpack.c.l.b16 %v116
    %v188 = vunpack.c.l.b16 %v117
    %v189 = vunpack.c.l.b16 %v118
    %v190 = vunpack.c.l.b16 %v119
    %v191 = vunpack.c.l.b16 %v120
    %v192 = vunpack.c.l.b16 %v121
    %v193 = vunpack.c.l.b16 %v122
    %v194 = vunpack.c.l.b16 %v123
    %v195 = vunpack.c.l.b16 %v124
    %v196 = vunpack.c.l.b16 %v125
    %v197 = vunpack.c.l.b16 %v126
    %v198 = vunpack.c.l.b16 %v127
    %v199 = vunpack.c.l.b16 %v128
    %v200 = vunpack.c.l.b16 %v129
    %v201 = vunpack.c.l.b16 %v130
    %v202 = vunpack.c.l.b16 %v131
    %v203 = vunpack.c.l.b16 %v132
    %v204 = vunpack.c.l.b16 %v133
    %v205 = vunpack.c.l.b16 %v134
    %v206 = vunpack.c.l.b16 %v135
    %v207 = vpack.c.b16 %v176, %v175
    %v208 = vpack.c.b16 %v178, %v177
    %v209 = vpack.c.b16 %v180, %v179
    %v210 = vpack.c.b16 %v182, %v181
    %v211 = vpack.c.b16 %v184, %v183
    %v212 = vpack.c.b16 %v186, %v185
    %v213 = vpack.c.b16 %v188, %v187
    %v214 = vpack.c.b16 %v190, %v189
    %v215 = vpack.c.b16 %v192, %v191
    %v216 = vpack.c.b16 %v194, %v193
    %v217 = vpack.c.b16 %v196, %v195
    %v218 = vpack.c.b16 %v198, %v197
    %v219 = vpack.c.b16 %v200, %v199
    %v220 = vpack.c.b16 %v202, %v201
    %v221 = vpack.c.b16 %v204, %v203
    %v222 = vpack.c.b16 %v206, %v205
    %239 = vmatprep.subr.bf16.mxu0 0
    %240 = vmatpush1.bf16.msra.mxu0 %v214
    %241 = vmatprep.subr.bf16.mxu0 0
    %242 = vmatpush1.bf16.msra.mxu0 %v213
    %243 = vmatprep.subr.bf16.mxu0 0
    %244 = vmatpush1.bf16.msra.mxu0 %v212
    %245 = vmatprep.subr.bf16.mxu0 0
    %246 = vmatpush1.bf16.msra.mxu0 %v211
    %247 = vmatprep.subr.bf16.mxu0 0
    %248 = vmatpush1.bf16.msra.mxu0 %v210
    %249 = vmatprep.subr.bf16.mxu0 0
    %250 = vmatpush1.bf16.msra.mxu0 %v209
    %251 = vmatprep.subr.bf16.mxu0 0
    %252 = vmatpush1.bf16.msra.mxu0 %v208
    %253 = vmatprep.subr.bf16.mxu0 0
    %254 = vmatpush1.bf16.msra.mxu0 %v207
    %255 = vmatprep.subr.bf16.mxu0 0
    %256 = vmatpush2.bf16.msra.mxu0 %v222
    %257 = vmatprep.subr.bf16.mxu0 0
    %258 = vmatpush2.bf16.msra.mxu0 %v221
    %259 = vmatprep.subr.bf16.mxu0 0
    %260 = vmatpush2.bf16.msra.mxu0 %v220
    %261 = vmatprep.subr.bf16.mxu0 0
    %262 = vmatpush2.bf16.msra.mxu0 %v219
    %263 = vmatprep.subr.bf16.mxu0 0
    %264 = vmatpush2.bf16.msra.mxu0 %v218
    %265 = vmatprep.subr.bf16.mxu0 0
    %266 = vmatpush2.bf16.msra.mxu0 %v217
    %267 = vmatprep.subr.bf16.mxu0 0
    %268 = vmatpush2.bf16.msra.mxu0 %v216
    %269 = vmatprep.subr.bf16.mxu0 0
    %270 = vmatpush2.bf16.msra.mxu0 %v215
    %271 = vmatprep.mubr.bf16.mxu0 %v103
    %272 = vmatmul.mubr.bf16.gmra.mxu0 %v102
    %v273 = vpop.f32.mrf.mxu0
    %v274 = vadd.f32 %v141, %v273
    %v275 = vpop.f32.mrf.mxu0
    %v276 = vpop.f32.mrf.mxu0
    %v277 = vpop.f32.mrf.mxu0
    %278 = vdwg.mxu0
    %v279 = vtanh.pop %v274
    %v280 = vmul.f32 %v279, 1.442695
    %v281 = vpow.pop %v280
    %283 = vrot.lane.b32.xlu0 %v281, 4
    %v284 = vpop.permute.xlu0 %283
    %v286 = vmul.f32 %v24, %v284
    %v287 = vadd.f32 %v286, %v274
    %v288 = vsel %vm48, %v279, 0.0
    %289 = vadd.xlane.f32.xlu0 %v288
    %v290 = vpop.xlane.xlu0 %289
    %291 = vst.msk [vmem:[#allocation2] sm:$0xff] %vm48, %v24
    %vm292 = vcmask 64544
    %293 = vst.msk [vmem:[#allocation2] sm:$0xff] %vm292, %v287
    %vm294 = vcmask 7168
    %295 = vst.msk [vmem:[%s6] sm:$0xff] %vm294, %v290
    // Predicated region
    $region22: #{tpu_custom_call.1} parent=1 // pred_check
      _
    $region23: #{tpu_custom_call.1} parent=1 // pred_check_branch
      %297 = sbr.rel (0) target = $region25
    $region24: #{tpu_custom_call.1} parent=1 // pred_region
      %s299 = ssub.s32 128, 128
      %300 = vsyncadd [#allocation3], %s299
      %s302 = sshll.u32 [#allocation2], 4
      %s303 = int_to_ptr.vmem [resolvable:$true] %s302
      %305 = dma.vmem_to_hbm [thread:$0]  %s303, 128, %s5, [#allocation3]
    $region25: #{tpu_custom_call.1} parent=1 // pred_fallthru
      _
    // Predicated region
    $region26: #{tpu_custom_call.1} parent=1 // pred_check
      _
    $region27: #{tpu_custom_call.1} parent=1 // pred_check_branch
      %307 = sbr.rel (0) target = $region29
    $region28: #{tpu_custom_call.1} parent=1 // pred_region
      _
    $region29: #{tpu_custom_call.1} parent=1 // pred_fallthru
      _
    // Predicated region
    $region30: #{tpu_custom_call.1} parent=1 // pred_check
      _
    $region31: #{tpu_custom_call.1} parent=1 // pred_check_branch
      %309 = sbr.rel (0) target = $region33
    $region32: #{tpu_custom_call.1} parent=1 // pred_region
      %310 = dma.done [#allocation3], 128
    $region33: #{tpu_custom_call.1} parent=1 // pred_fallthru
      _
    // Predicated region
    $region34: #{tpu_custom_call.1} parent=1 // pred_check
      _
    $region35: #{tpu_custom_call.1} parent=1 // pred_check_branch
      %312 = sbr.rel (0) target = $region37
    $region36: #{tpu_custom_call.1} parent=1 // pred_region
      _
    $region37: #{tpu_custom_call.1} parent=1 // pred_fallthru
      _
    %313 = vsyncpa [#allocation3], 1

</llo_original>
